<compile_context>
chip_gen: v6e
topology: v6e:2x2x1
jax: 0.10.0
libtpu: 0.0.40
codegen_flags: <defaults>
</compile_context>

<pallas_src>
import jax
import jax.numpy as jnp
from jax import lax
from jax.experimental import pallas as pl
from jax.experimental.pallas import tpu as pltpu

_TARGET_TILE_BYTES = 4 * 1024 * 1024      # ~4 MiB of input per tile per buffer
_MAX_BLOCK_ROWS = 8192                    # hard cap on tile height
_FAST_PATH_ELEMS = 1 << 18                # below this, fused XLA beats a kernel launch
_MAX_LANE_GROUPS_UNROLLED = 64            # unroll limit for the lane-group adds


def _kl_loss_jax(mean, logvar):
    """Pure-JAX reference / tiny-input fast path (matches PyTorch semantics)."""
    m = mean.astype(jnp.float32)
    lv = logvar.astype(jnp.float32)
    elem = 1.0 + lv - m * m - jnp.exp(lv)
    return jnp.mean(-0.5 * jnp.sum(elem, axis=1), axis=0)


def _make_kl_kernel(tb, D, B, need_mask):
    """Build the per-tile partial-sum kernel for static (tb, D, B)."""
    nlg = D // 128
    lane_partial = (D % 128 == 0) and (1 <= nlg <= _MAX_LANE_GROUPS_UNROLLED)

    def kernel(mean_ref, logvar_ref, out_ref):
        m = mean_ref[...].astype(jnp.float32)
        lv = logvar_ref[...].astype(jnp.float32)
        # exp() runs on the EUP slot (otherwise idle); kernel is HBM-bandwidth bound.
        elem = 1.0 + lv - m * m - jnp.exp(lv)

        if need_mask:
            # Ragged last block: rows >= B hold unspecified data (exp of garbage
            # can be Inf/NaN), so zero them before reducing.  select() does not
            # propagate NaN from the unselected branch.
            row = lax.broadcasted_iota(jnp.int32, (tb, D), 0) + pl.program_id(0) * tb
            elem = jnp.where(row < B, elem, 0.0)

        if lane_partial:
            # Shape-preserving partial: fold rows 8-at-a-time (VPU adds over whole
            # vregs, no cross-lane movement), then add the D//128 lane groups
            # (lane-aligned slices -> plain vreg adds).  Store the full (8, 128)
            # block of per-lane partials with one unmasked store.
            folded = elem.reshape(tb // 8, 8, D).sum(axis=0)          # (8, D)
            part = folded[:, 0:128]
            for j in range(1, nlg):
                part = part + folded[:, j * 128:(j + 1) * 128]
            out_ref[...] = part
        else:
            # General-D fallback: full scalar reduce; scalar lands at [0, 0] of the
            # block, rest zero, so the wrapper's jnp.sum(partials) stays correct.
            s = jnp.sum(elem)
            ri = lax.broadcasted_iota(jnp.int32, (8, 128), 0)
            ci = lax.broadcasted_iota(jnp.int32, (8, 128), 1)
            out_ref[...] = jnp.where((ri == 0) & (ci == 0), s, 0.0)

    return kernel


def kl_loss(mean, logvar, *, fast_path_elems=_FAST_PATH_ELEMS):
    """Pallas implementation of KLLoss.forward(mean, logvar) -> scalar (float32)."""
    assert mean.shape == logvar.shape and mean.ndim == 2
    B, D = mean.shape
    total = B * D

    if total < fast_path_elems:
        # Tiny problems: pallas_call launch + final-sum dispatch dominates; a
        # single fused XLA elementwise+reduce kernel is strictly faster.
        return _kl_loss_jax(mean, logvar)

    itemsize = jnp.dtype(mean.dtype).itemsize
    sub = 16 if itemsize < 4 else 8            # bf16 packs 16 sublanes per vreg

    # Tile height: ~4 MiB of input per tile, sublane aligned, capped so medium
    # problems still yield >= 2 grid blocks (keeps both v7x TensorCores busy).
    # TODO(synk): for extremely large D (> ~1M) a single sub-row tile exceeds the
    # VMEM budget; a D-axis grid split would be needed for that corner case.
    tb = _TARGET_TILE_BYTES // max(1, D * itemsize)
    tb = max(sub, (tb // sub) * sub)
    tb = min(tb, _MAX_BLOCK_ROWS)
    b_pad = -(-B // sub) * sub                 # B rounded up to sublane multiple
    if b_pad > sub:
        half = -(-((B + 1) // 2) // sub) * sub # ceil(B/2) rounded up to sub
        tb = min(tb, half)
    tb = min(tb, b_pad)
    g = -(-B // tb)                            # = pl.cdiv(B, tb)
    need_mask = (B % tb) != 0

    kernel = _make_kl_kernel(tb, D, B, need_mask)

    partials = pl.pallas_call(
        kernel,
        out_shape=jax.ShapeDtypeStruct((g * 8, 128), jnp.float32),
        grid_spec=pltpu.PrefetchScalarGridSpec(
            num_scalar_prefetch=0,
            grid=(g,),
            in_specs=[
                pl.BlockSpec((tb, D), lambda i: (i, 0)),
                pl.BlockSpec((tb, D), lambda i: (i, 0)),
            ],
            out_specs=pl.BlockSpec((8, 128), lambda i: (i, 0)),
        ),
        compiler_params=pltpu.CompilerParams(
            dimension_semantics=("parallel",),   # v7x: both TCs split the batch
            vmem_limit_bytes=32 * 1024 * 1024,   # safe ceiling on v5e/v6e/v7x
        ),
    )(mean, logvar)

    return (-0.5 / B) * jnp.sum(partials)


if __name__ == "__main__":
    key = jax.random.PRNGKey(0)
    k = jax.random.split(key, 8)

    # 1) Tiny VAE-latent shape (public API -> fast path), semantics check.
    B, D = 8, 32
    mean = jax.random.normal(k[0], (B, D), jnp.float32)
    logvar = 0.1 * jax.random.normal(k[1], (B, D), jnp.float32)
    out = kl_loss(mean, logvar)
    jax.block_until_ready(out)
    assert jnp.allclose(out, _kl_loss_jax(mean, logvar), rtol=1e-5, atol=1e-5), out

    # 2) Kernel path: D % 128 == 0, two grid blocks, no ragged tail.
    B, D = 64, 256
    mean = jax.random.normal(k[2], (B, D), jnp.float32)
    logvar = 0.1 * jax.random.normal(k[3], (B, D), jnp.float32)
    out = kl_loss(mean, logvar, fast_path_elems=0)
    jax.block_until_ready(out)
    assert jnp.allclose(out, _kl_loss_jax(mean, logvar), rtol=1e-5, atol=1e-5), out

    # 3) Kernel path: D not a multiple of 128 + ragged last block (mask exercised).
    B, D = 37, 96
    mean = jax.random.normal(k[4], (B, D), jnp.float32)
    logvar = 0.1 * jax.random.normal(k[5], (B, D), jnp.float32)
    out = kl_loss(mean, logvar, fast_path_elems=0)
    jax.block_until_ready(out)
    assert jnp.allclose(out, _kl_loss_jax(mean, logvar), rtol=1e-5, atol=1e-5), out

    # 4) bf16 inputs: 16-sublane tile alignment + ragged tail.
    B, D = 48, 128
    mean = jax.random.normal(k[6], (B, D), jnp.float32).astype(jnp.bfloat16)
    logvar = (0.1 * jax.random.normal(k[7], (B, D), jnp.float32)).astype(jnp.bfloat16)
    out = kl_loss(mean, logvar, fast_path_elems=0)
    jax.block_until_ready(out)
    assert jnp.allclose(out, _kl_loss_jax(mean, logvar), rtol=1e-3, atol=1e-3), out

    print("KERNEL_OK")
</pallas_src>

<mosaic_0001>
module attributes {stable_mosaic.version = 11 : i64} {
  func.func @kernel(%arg0: i32, %arg1: memref<32x256xf32, #tpu.memory_space<vmem>>, %arg2: memref<32x256xf32, #tpu.memory_space<vmem>>, %arg3: memref<8x128xf32, #tpu.memory_space<vmem>>) attributes {dimension_semantics = [#tpu.dimension_semantics<parallel>], iteration_bounds = array<i64: 2>, scalar_prefetch = 0 : i64, scratch_operands = 0 : i64, tpu.core_type = #tpu.core_type<tc>, window_params = [{transform_indices = @transform_0, window_bounds = array<i64: 32, 256>}, {transform_indices = @transform_1, window_bounds = array<i64: 32, 256>}, {transform_indices = @transform_2, window_bounds = array<i64: 8, 128>}]} {
    %c0 = arith.constant 0 : index
    %c0_0 = arith.constant 0 : index
    %0 = vector.load %arg1[%c0, %c0_0] : memref<32x256xf32, #tpu.memory_space<vmem>>, vector<32x256xf32>
    %c0_1 = arith.constant 0 : index
    %c0_2 = arith.constant 0 : index
    %1 = vector.load %arg2[%c0_1, %c0_2] : memref<32x256xf32, #tpu.memory_space<vmem>>, vector<32x256xf32>
    %cst = arith.constant 1.000000e+00 : f32
    %2 = vector.broadcast %cst : f32 to vector<32x256xf32>
    %3 = arith.addf %2, %1 : vector<32x256xf32>
    %4 = arith.mulf %0, %0 : vector<32x256xf32>
    %5 = arith.subf %3, %4 : vector<32x256xf32>
    %6 = math.exp %1 : vector<32x256xf32>
    %7 = arith.subf %5, %6 : vector<32x256xf32>
    %8 = vector.shape_cast %7 : vector<32x256xf32> to vector<4x8x256xf32>
    %cst_3 = arith.constant dense<0.000000e+00> : vector<8x256xf32>
    %9 = vector.multi_reduction <add>, %8, %cst_3 [0] : vector<4x8x256xf32> to vector<8x256xf32>
    %10 = vector.extract_strided_slice %9 {offsets = [0, 0], sizes = [8, 128], strides = [1, 1]} : vector<8x256xf32> to vector<8x128xf32>
    %11 = vector.extract_strided_slice %9 {offsets = [0, 128], sizes = [8, 128], strides = [1, 1]} : vector<8x256xf32> to vector<8x128xf32>
    %12 = arith.addf %10, %11 : vector<8x128xf32>
    %c0_4 = arith.constant 0 : index
    %c0_5 = arith.constant 0 : index
    %13 = vector.load %arg3[%c0_4, %c0_5] : memref<8x128xf32, #tpu.memory_space<vmem>>, vector<8x128xf32>
    tpu.vector_store %arg3[%c0_4, %c0_5], %12 {strides = array<i32>} : memref<8x128xf32, #tpu.memory_space<vmem>>, vector<8x128xf32>,
    return
  }
  func.func @transform_0(%arg0: i32) -> (i32, i32) {
    %c0_i32 = arith.constant 0 : i32
    %c0_i32_0 = arith.constant 0 : i32
    return %arg0, %c0_i32 : i32, i32
  }
  func.func @transform_1(%arg0: i32) -> (i32, i32) {
    %c0_i32 = arith.constant 0 : i32
    %c0_i32_0 = arith.constant 0 : i32
    return %arg0, %c0_i32 : i32, i32
  }
  func.func @transform_2(%arg0: i32) -> (i32, i32) {
    %c0_i32 = arith.constant 0 : i32
    %c0_i32_0 = arith.constant 0 : i32
    return %arg0, %c0_i32 : i32, i32
  }
}

</mosaic_0001>

<llo_original>
// kernel: tpu_custom_call.1
$region0: #{tpu_custom_call.1}
  #allocation0 [shape = 'u32[]', space=smem, size = 0x4, offset = 0x4, fixed_abs, tag = 'smem constant byte address 0x4 - core index']
  #allocation1 [shape = 'u32[144,128]{1,0:T(1,128)}', space=vmem, size = 0x12000, scoped, tag = 'internal scratch']
  %s0 = inlined_call_operand.hbm [shape: f32[64,256], index: 0, kind: input, shape index: {}]
  %s1 = inlined_call_operand.hbm [shape: f32[64,256], index: 1, kind: input, shape index: {}]
  %s2 = inlined_call_operand.hbm [shape: f32[16,128], index: 2, kind: output, shape index: {}]
  %s3 = sld [smem:[#allocation0]]
  $region49: #{tpu_custom_call.1} parent=0
    _
  %s5 = ssub.s32 1, %s3
  %s6 = scalar_select 0, %s5, %s3
  $region1: #{tpu_custom_call.1} parent=0
    #allocation2 [shape = 'u8[65536]{0}', space=vmem, size = 0x10000, scoped, tag = 'input window, operand 0']
    #allocation3 [shape = 's32[2]{0}', space=sflag, size = 0x8, scoped, tag = 'scoped memory for tpu_custom_call.1']
    #allocation4 [shape = 's32[2]{0}', space=sflag, size = 0x8, scoped, tag = 'scoped memory for tpu_custom_call.1']
    #allocation5 [shape = 'u8[65536]{0}', space=vmem, size = 0x10000, scoped, tag = 'input window, operand 1']
    #allocation6 [shape = 's32[2]{0}', space=sflag, size = 0x8, scoped, tag = 'scoped memory for tpu_custom_call.1']
    #allocation7 [shape = 'u8[8192]{0}', space=vmem, size = 0x2000, scoped, tag = 'output window, operand 0']
    %7 = vsyncpa [#allocation3], 0
    %s8 = scalar_lea.sflag [#allocation3], 1
    %9 = vsyncpa %s8, 0
    %10 = vsyncpa [#allocation6], 0
    %s11 = scalar_lea.sflag [#allocation6], 1
    %12 = vsyncpa %s11, 0
    %13 = vsyncpa [#allocation4], 0
    %s14 = scalar_lea.sflag [#allocation4], 1
    %15 = vsyncpa %s14, 0
    loop: start=0, step=1, limit=4
    $region2: #{tpu_custom_call.1} parent=1 // loop_pre_header
      _
    $region3: #{tpu_custom_call.1} parent=1 // loop_header
      %s17 = sphi 0, %s21
      %p18 = scmp.ge.s32.totalorder %s17, 4
      %s27 = sphi 0, %s29
      %s30 = sphi 0, %s27
      %s31 = sphi 0, %s30
      %s47 = sphi 0, %s31
      %s53 = sphi 0, %s55
      %s56 = sphi 0, %s53
      %s57 = sphi 0, %s56
      %s73 = sphi 0, %s57
      %s79 = sphi 0, %s81
      %s82 = sphi 0, %s79
      %s83 = sphi 0, %s82
      %s99 = sphi 0, %s83
    $region4: #{tpu_custom_call.1} parent=1 // loop_header_branch
      %20 = sbr.rel (%p18) target = $region8
    $region5: #{tpu_custom_call.1} parent=1 // loop_body
      %s22 = ssub.s32 %s17, 1
      %s23 = ssub.s32 %s17, 2
      %s24 = sadd.s32 %s17, 1
      %s25 = ssub.s32 %s17, %s24
      %p26 = scmp.eq.s32.totalorder %s25, 0
      %s28 = sadd.s32 %s27, 1
      %s29 = scalar_select %p26, %s27, %s28
      %p32 = pneg %p26
      %p33 = scmp.eq.s32.totalorder %s17, 1
      %p34 = por %p32, %p33
      %p35 = scmp.ne.s32.totalorder %s27, %s30
      %p36 = scmp.eq.s32.totalorder %s17, 0
      %p37 = por %p35, %p36
      %p38 = scmp.ne.s32.totalorder %s27, %s30
      %p39 = scmp.eq.s32.totalorder %s22, 1
      %p40 = por %p38, %p39
      %p41 = scmp.ne.s32.totalorder %s30, %s31
      %p42 = scmp.eq.s32.totalorder %s22, 0
      %p43 = por %p41, %p42
      %p44 = scmp.ne.s32.totalorder %s30, %s31
      %p45 = scmp.eq.s32.totalorder %s23, 1
      %p46 = por %p44, %p45
      %p48 = scmp.ne.s32.totalorder %s31, %s47
      %p49 = scmp.eq.s32.totalorder %s23, 0
      %p50 = por %p48, %p49
      %s51 = ssub.s32 %s17, %s24
      %p52 = scmp.eq.s32.totalorder %s51, 0
      %s54 = sadd.s32 %s53, 1
      %s55 = scalar_select %p52, %s53, %s54
      %p58 = pneg %p52
      %p59 = scmp.eq.s32.totalorder %s17, 1
      %p60 = por %p58, %p59
      %p61 = scmp.ne.s32.totalorder %s53, %s56
      %p62 = scmp.eq.s32.totalorder %s17, 0
      %p63 = por %p61, %p62
      %p64 = scmp.ne.s32.totalorder %s53, %s56
      %p65 = scmp.eq.s32.totalorder %s22, 1
      %p66 = por %p64, %p65
      %p67 = scmp.ne.s32.totalorder %s56, %s57
      %p68 = scmp.eq.s32.totalorder %s22, 0
      %p69 = por %p67, %p68
      %p70 = scmp.ne.s32.totalorder %s56, %s57
      %p71 = scmp.eq.s32.totalorder %s23, 1
      %p72 = por %p70, %p71
      %p74 = scmp.ne.s32.totalorder %s57, %s73
      %p75 = scmp.eq.s32.totalorder %s23, 0
      %p76 = por %p74, %p75
      %s77 = ssub.s32 %s17, %s24
      %p78 = scmp.eq.s32.totalorder %s77, 0
      %s80 = sadd.s32 %s79, 1
      %s81 = scalar_select %p78, %s79, %s80
      %p84 = pneg %p78
      %p85 = scmp.eq.s32.totalorder %s17, 1
      %p86 = por %p84, %p85
      %p87 = scmp.ne.s32.totalorder %s79, %s82
      %p88 = scmp.eq.s32.totalorder %s17, 0
      %p89 = por %p87, %p88
      %p90 = scmp.ne.s32.totalorder %s79, %s82
      %p91 = scmp.eq.s32.totalorder %s22, 1
      %p92 = por %p90, %p91
      %p93 = scmp.ne.s32.totalorder %s82, %s83
      %p94 = scmp.eq.s32.totalorder %s22, 0
      %p95 = por %p93, %p94
      %p96 = scmp.ne.s32.totalorder %s82, %s83
      %p97 = scmp.eq.s32.totalorder %s23, 1
      %p98 = por %p96, %p97
      %p100 = scmp.ne.s32.totalorder %s83, %s99
      %p101 = scmp.eq.s32.totalorder %s23, 0
      %p102 = por %p100, %p101
      %p103 = scmp.le.s32.totalorder 1, %s17
      %p104 = scmp.lt.s32.totalorder %s17, 3
      %p105 = pnand %p103, %p104
      %p106 = pneg %p105
      // Predicated region
      $region9: #{tpu_custom_call.1} parent=5 // pred_check
        _
      $region10: #{tpu_custom_call.1} parent=5 // pred_check_branch
        %108 = sbr.rel (%p105) target = $region12
      $region11: #{tpu_custom_call.1} parent=5 // pred_region
        %s109 = ssub.s32 %s17, 1
      $region12: #{tpu_custom_call.1} parent=5 // pred_fallthru
        _
      %p110 = scmp.lt.s32.totalorder %s17, 2
      // Predicated region
      $region13: #{tpu_custom_call.1} parent=5 // pred_check
        %p111 = pneg %p110
      $region14: #{tpu_custom_call.1} parent=5 // pred_check_branch
        %113 = sbr.rel (%p111) target = $region16
      $region15: #{tpu_custom_call.1} parent=5 // pred_region
        // Predicated region
        $region17: #{tpu_custom_call.1} parent=15 // pred_check
          %p114 = pneg %p37
        $region18: #{tpu_custom_call.1} parent=15 // pred_check_branch
          %116 = sbr.rel (%p114) target = $region20
        $region19: #{tpu_custom_call.1} parent=15 // pred_region
          %s117 = sand.u32 %s27, 1
          %s118 = scalar_lea.sflag [#allocation3], %s117
          %s119 = sand.u32 %s27, 1
          %s120 = smul.addr %s119, 64
          %s121 = scalar_lea.vmem [#allocation2], %s120
          %s122 = smul.u32 4, %s17
          %s124 = ssub.s32 1024, 1024
          %125 = vsyncadd %s118, %s124
          %s126 = smul.addr %s122, 2
          %s127 = smul.addr %s126, 128
          %s128 = scalar_lea.hbm %s0, %s127
          %s129 = sshll.u32 %s121, 4
          %s130 = int_to_ptr.vmem [resolvable:$true] %s129
          %135 = dma.hbm_to_vmem [thread:$0]  %s128, 1024, %s130, %s118, 256, 256, 16
        $region20: #{tpu_custom_call.1} parent=15 // pred_fallthru
          _
        // Predicated region
        $region21: #{tpu_custom_call.1} parent=15 // pred_check
          %p136 = pneg %p63
        $region22: #{tpu_custom_call.1} parent=15 // pred_check_branch
          %138 = sbr.rel (%p136) target = $region24
        $region23: #{tpu_custom_call.1} parent=15 // pred_region
          %s139 = sand.u32 %s53, 1
          %s140 = scalar_lea.sflag [#allocation6], %s139
          %s141 = sand.u32 %s53, 1
          %s142 = smul.addr %s141, 64
          %s143 = scalar_lea.vmem [#allocation5], %s142
          %s144 = smul.u32 4, %s17
          %s146 = ssub.s32 1024, 1024
          %147 = vsyncadd %s140, %s146
          %s148 = smul.addr %s144, 2
          %s149 = smul.addr %s148, 128
          %s150 = scalar_lea.hbm %s1, %s149
          %s151 = sshll.u32 %s143, 4
          %s152 = int_to_ptr.vmem [resolvable:$true] %s151
          %157 = dma.hbm_to_vmem [thread:$0]  %s150, 1024, %s152, %s140, 256, 256, 16
        $region24: #{tpu_custom_call.1} parent=15 // pred_fallthru
          _
      $region16: #{tpu_custom_call.1} parent=5 // pred_fallthru
        _
      %p158 = scmp.le.s32.totalorder 1, %s17
      %p159 = scmp.lt.s32.totalorder %s17, 3
      %p160 = pnand %p158, %p159
      %p161 = pneg %p160
      // Predicated region
      $region25: #{tpu_custom_call.1} parent=5 // pred_check
        _
      $region26: #{tpu_custom_call.1} parent=5 // pred_check_branch
        %163 = sbr.rel (%p160) target = $region28
      $region27: #{tpu_custom_call.1} parent=5 // pred_region
        %s164 = ssub.s32 %s17, 1
        %s165 = sand.u32 %s30, 1
        %s166 = scalar_lea.sflag [#allocation3], %s165
        %s167 = sand.u32 %s30, 1
        %s168 = smul.addr %s167, 64
        %s169 = scalar_lea.vmem [#allocation2], %s168
        // Predicated region
        $region29: #{tpu_custom_call.1} parent=27 // pred_check
          %p170 = pneg %p43
        $region30: #{tpu_custom_call.1} parent=27 // pred_check_branch
          %172 = sbr.rel (%p170) target = $region32
        $region31: #{tpu_custom_call.1} parent=27 // pred_region
          %173 = dma.done %s166, 1024
        $region32: #{tpu_custom_call.1} parent=27 // pred_fallthru
          _
        %s174 = sand.u32 %s56, 1
        %s175 = scalar_lea.sflag [#allocation6], %s174
        %s176 = sand.u32 %s56, 1
        %s177 = smul.addr %s176, 64
        %s178 = scalar_lea.vmem [#allocation5], %s177
        // Predicated region
        $region33: #{tpu_custom_call.1} parent=27 // pred_check
          %p179 = pneg %p69
        $region34: #{tpu_custom_call.1} parent=27 // pred_check_branch
          %181 = sbr.rel (%p179) target = $region36
        $region35: #{tpu_custom_call.1} parent=27 // pred_region
          %182 = dma.done %s175, 1024
        $region36: #{tpu_custom_call.1} parent=27 // pred_fallthru
          _
        %s183 = sand.u32 %s30, 1
        %s184 = scalar_lea.sflag [#allocation3], %s183
        %s185 = sand.u32 %s30, 1
        %s186 = smul.addr %s185, 64
        %s187 = scalar_lea.vmem [#allocation2], %s186
        %p188 = pneg %p43
        %p189 = pneg %p40
        %s190 = sand.u32 %s56, 1
        %s191 = scalar_lea.sflag [#allocation6], %s190
        %s192 = sand.u32 %s56, 1
        %s193 = smul.addr %s192, 64
        %s194 = scalar_lea.vmem [#allocation5], %s193
        %p195 = pneg %p69
        %p196 = pneg %p66
        %p197 = pneg %p95
        %p198 = pneg %p92
        %s199 = sand.u32 %s82, 1
        %s200 = scalar_lea.sflag [#allocation4], %s199
        %s201 = sand.u32 %s82, 1
        %s202 = smul.addr %s201, 8
        %s203 = scalar_lea.vmem [#allocation7], %s202
        %s204 = smul.u32 4, %s22
        %s205 = smul.u32 4, %s22
        %v206 = vld [vmem:[%s169] sm:$0xff]
        %v207 = vld [vmem:[%s169 + $0x8] sm:$0xff]
        %v208 = vld [vmem:[%s169 + $0x10] sm:$0xff]
        %v209 = vld [vmem:[%s169 + $0x18] sm:$0xff]
        %v210 = vld [vmem:[%s169 + $0x20] sm:$0xff]
        %v211 = vld [vmem:[%s169 + $0x28] sm:$0xff]
        %v212 = vld [vmem:[%s169 + $0x30] sm:$0xff]
        %v213 = vld [vmem:[%s169 + $0x38] sm:$0xff]
        %v214 = vld [vmem:[%s178] sm:$0xff]
        %v215 = vld [vmem:[%s178 + $0x8] sm:$0xff]
        %v216 = vld [vmem:[%s178 + $0x10] sm:$0xff]
        %v217 = vld [vmem:[%s178 + $0x18] sm:$0xff]
        %v218 = vld [vmem:[%s178 + $0x20] sm:$0xff]
        %v219 = vld [vmem:[%s178 + $0x28] sm:$0xff]
        %v220 = vld [vmem:[%s178 + $0x30] sm:$0xff]
        %v221 = vld [vmem:[%s178 + $0x38] sm:$0xff]
        %v222 = vadd.f32 %v214, 1.0
        %v223 = vadd.f32 %v215, 1.0
        %v224 = vadd.f32 %v216, 1.0
        %v225 = vadd.f32 %v217, 1.0
        %v226 = vadd.f32 %v218, 1.0
        %v227 = vadd.f32 %v219, 1.0
        %v228 = vadd.f32 %v220, 1.0
        %v229 = vadd.f32 %v221, 1.0
        %v230 = vmul.f32 %v206, %v206
        %v231 = vmul.f32 %v207, %v207
        %v232 = vmul.f32 %v208, %v208
        %v233 = vmul.f32 %v209, %v209
        %v234 = vmul.f32 %v210, %v210
        %v235 = vmul.f32 %v211, %v211
        %v236 = vmul.f32 %v212, %v212
        %v237 = vmul.f32 %v213, %v213
        %v238 = vsub.f32 %v222, %v230
        %v239 = vsub.f32 %v223, %v231
        %v240 = vsub.f32 %v224, %v232
        %v241 = vsub.f32 %v225, %v233
        %v242 = vsub.f32 %v226, %v234
        %v243 = vsub.f32 %v227, %v235
        %v244 = vsub.f32 %v228, %v236
        %v245 = vsub.f32 %v229, %v237
        %v246 = vmul.f32 %v214, 1.442695
        %v247 = vpow.pop %v246
        %v248 = vmul.f32 %v215, 1.442695
        %v249 = vpow.pop %v248
        %v250 = vmul.f32 %v216, 1.442695
        %v251 = vpow.pop %v250
        %v252 = vmul.f32 %v217, 1.442695
        %v253 = vpow.pop %v252
        %v254 = vmul.f32 %v218, 1.442695
        %v255 = vpow.pop %v254
        %v256 = vmul.f32 %v219, 1.442695
        %v257 = vpow.pop %v256
        %v258 = vmul.f32 %v220, 1.442695
        %v259 = vpow.pop %v258
        %v260 = vmul.f32 %v221, 1.442695
        %v261 = vpow.pop %v260
        %v262 = vsub.f32 %v238, %v247
        %v263 = vsub.f32 %v239, %v249
        %v264 = vsub.f32 %v240, %v251
        %v265 = vsub.f32 %v241, %v253
        %v266 = vsub.f32 %v242, %v255
        %v267 = vsub.f32 %v243, %v257
        %v268 = vsub.f32 %v244, %v259
        %v269 = vsub.f32 %v245, %v261
        %v270 = vadd.f32 %v262, %v264
        %v271 = vadd.f32 %v270, %v266
        %v272 = vadd.f32 %v271, %v268
        %v273 = vadd.f32 %v263, %v265
        %v274 = vadd.f32 %v273, %v267
        %v275 = vadd.f32 %v274, %v269
        %v276 = vadd.f32 %v272, %v275
        %277 = vst [vmem:[%s203] sm:$0xff] %v276
        %s278 = sand.u32 %s82, 1
        %s279 = scalar_lea.sflag [#allocation4], %s278
        %s280 = sand.u32 %s82, 1
        %s281 = smul.addr %s280, 8
        %s282 = scalar_lea.vmem [#allocation7], %s281
        // Predicated region
        $region37: #{tpu_custom_call.1} parent=27 // pred_check
          %p283 = pneg %p92
        $region38: #{tpu_custom_call.1} parent=27 // pred_check_branch
          %285 = sbr.rel (%p283) target = $region40
        $region39: #{tpu_custom_call.1} parent=27 // pred_region
          %s287 = ssub.s32 128, 128
          %288 = vsyncadd %s279, %s287
          %s289 = smul.addr %s22, 128
          %s290 = scalar_lea.hbm %s2, %s289
          %s292 = sshll.u32 %s282, 4
          %s293 = int_to_ptr.vmem [resolvable:$true] %s292
          %295 = dma.vmem_to_hbm [thread:$0]  %s293, 128, %s290, %s279
        $region40: #{tpu_custom_call.1} parent=27 // pred_fallthru
          _
      $region28: #{tpu_custom_call.1} parent=5 // pred_fallthru
        _
      %p296 = scmp.le.s32.totalorder 2, %s17
      // Predicated region
      $region41: #{tpu_custom_call.1} parent=5 // pred_check
        %p297 = pneg %p296
      $region42: #{tpu_custom_call.1} parent=5 // pred_check_branch
        %299 = sbr.rel (%p297) target = $region44
      $region43: #{tpu_custom_call.1} parent=5 // pred_region
        %s300 = ssub.s32 %s17, 2
        // Predicated region
        $region45: #{tpu_custom_call.1} parent=43 // pred_check
          %p301 = pneg %p98
        $region46: #{tpu_custom_call.1} parent=43 // pred_check_branch
          %303 = sbr.rel (%p301) target = $region48
        $region47: #{tpu_custom_call.1} parent=43 // pred_region
          %s304 = sand.u32 %s83, 1
          %s305 = scalar_lea.sflag [#allocation4], %s304
          %s306 = sand.u32 %s83, 1
          %s307 = smul.addr %s306, 8
          %s308 = scalar_lea.vmem [#allocation7], %s307
          %309 = dma.done %s305, 128
        $region48: #{tpu_custom_call.1} parent=43 // pred_fallthru
          _
      $region44: #{tpu_custom_call.1} parent=5 // pred_fallthru
        _
    $region6: #{tpu_custom_call.1} parent=1 // loop_footer
      %s21 = sadd.s32 1, %s17
    $region7: #{tpu_custom_call.1} parent=1 // loop_footer_branch
      %16 = sbr.rel target = $region3
    $region8: #{tpu_custom_call.1} parent=1 // loop_exit
      _
    %310 = vsyncpa [#allocation3], 1
    %s311 = scalar_lea.sflag [#allocation3], 1
    %312 = vsyncpa %s311, 1
    %313 = vsyncpa [#allocation6], 1
    %s314 = scalar_lea.sflag [#allocation6], 1
    %315 = vsyncpa %s314, 1
    %316 = vsyncpa [#allocation4], 1
    %s317 = scalar_lea.sflag [#allocation4], 1
    %318 = vsyncpa %s317, 1

</llo_original>
